<compile_context>
chip_gen: v7x
topology: tpu7x:2x2x1
jax: 0.10.0
libtpu: 0.0.40
codegen_flags: <defaults>
</compile_context>

<pallas_src>
import functools

import jax
import jax.numpy as jnp
from jax.experimental import pallas as pl
from jax.experimental.pallas import tpu as pltpu

LANE = 128
SUBLANE = 8
MAX_BLOCK_ROWS = 4096            # (4096, 128) f32 = 2 MiB per input per tile
NUM_SHARDS = 2                   # v7x has 2 TensorCores; harmless on v5e/v6e
VMEM_LIMIT_BYTES = 40 * 1024 * 1024


def _static_pow(x, gamma):
    """x ** gamma with the exponent known at trace time.

    Integer-valued gamma is unrolled into multiplies (exponentiation by
    squaring); otherwise falls back to the generic pow.
    """
    g = float(gamma)
    if g == int(g) and int(g) >= 0:
        n = int(g)
        if n == 0:
            return jnp.ones_like(x)
        result = None
        base = x
        while True:
            if n & 1:
                result = base if result is None else result * base
            n >>= 1
            if n == 0:
                break
            base = base * base
        return result
    return x ** g


def _focal_kernel(x_ref, t_ref, out_ref, *, gamma, total_blocks, steps,
                  tile_elems, tail_rem, needs_gate):
    c = pl.program_id(0)   # shard axis ("parallel"; one per TC on v7x)
    i = pl.program_id(1)   # reduction axis within the shard ("arbitrary")

    @pl.when(i == 0)
    def _():
        out_ref[...] = jnp.zeros_like(out_ref)

    # Cast to f32 in-kernel (inputs may arrive in their native dtype, e.g. bf16).
    x = x_ref[...].astype(jnp.float32)
    t = t_ref[...].astype(jnp.float32)

    # Numerically-stable BCE-with-logits (matches torch.nn.BCEWithLogitsLoss):
    #   bce = max(x, 0) - x * t + log(1 + exp(-|x|))
    bce = jnp.maximum(x, 0.0) - x * t + jnp.log1p(jnp.exp(-jnp.abs(x)))
    pt = jnp.exp(-bce)
    # alpha and the 1/N of the mean are applied once in the wrapper.
    focal = bce * _static_pow(1.0 - pt, gamma)

    rows, cols = focal.shape

    def accumulate(vals):
        # Fold the (rows, 128) tile into the single-vreg (8, 128) output block
        # with a tree of VPU adds -> no large-buffer read-modify-write.
        out_ref[...] += vals.reshape(rows // SUBLANE, SUBLANE, cols).sum(axis=0)

    bid = c * steps + i                      # global block index of this step
    has_tail = tail_rem < tile_elems

    if not needs_gate and not has_tail:
        # Static fast path: every element of every block is valid.
        accumulate(focal)
    else:
        is_tail = bid == total_blocks - 1
        in_range = bid < total_blocks        # false only for the clamped dup

        if needs_gate:
            plain = (jnp.logical_and(in_range, jnp.logical_not(is_tail))
                     if has_tail else in_range)
        else:
            plain = jnp.logical_not(is_tail)

        @pl.when(plain)
        def _():
            accumulate(focal)

        if has_tail:
            # Only the globally-last block carries padding / over-read garbage;
            # the select (not a multiply) drops any Inf/NaN it may contain.
            @pl.when(is_tail)
            def _():
                row_idx = jax.lax.broadcasted_iota(jnp.int32, (rows, cols), 0)
                col_idx = jax.lax.broadcasted_iota(jnp.int32, (rows, cols), 1)
                local = row_idx * cols + col_idx   # tile-local -> int32-safe
                accumulate(jnp.where(local < tail_rem, focal, 0.0))


def focal_loss(inputs, targets, alpha=0.25, gamma=5.0, *,
               max_block_rows=MAX_BLOCK_ROWS):
    """Pallas TPU implementation of FocalLoss.forward (returns a scalar)."""
    assert inputs.shape == targets.shape
    n_valid = int(inputs.size)
    assert n_valid > 0

    x = inputs.reshape(-1)
    t = targets.reshape(-1)

    # Lane-dense (rows, 128) layout with rows a multiple of 8 so every block
    # folds cleanly into the (8, 128) accumulator.  Padding (an extra XLA copy)
    # only happens when the element count is not already a multiple of 1024;
    # the padded zeros are masked out in-kernel via tail_rem.
    padded_len = pl.cdiv(n_valid, SUBLANE * LANE) * (SUBLANE * LANE)
    if padded_len != n_valid:
        x = jnp.pad(x, (0, padded_len - n_valid))
        t = jnp.pad(t, (0, padded_len - n_valid))

    rows = padded_len // LANE
    x = x.reshape(rows, LANE)
    t = t.reshape(rows, LANE)

    block_rows = min(int(max_block_rows), rows)   # both are multiples of 8
    assert block_rows % SUBLANE == 0
    total_blocks = int(pl.cdiv(rows, block_rows))
    tile_elems = block_rows * LANE
    # Valid elements in the globally-last block (covers both the zero padding
    # above and any Pallas over-read rows of a partial last block).
    tail_rem = n_valid - (total_blocks - 1) * tile_elems

    # Split the blocks across a leading "parallel" axis so v7x's two
    # TensorCores take ~half each; on a single-TC chip it is an outer loop.
    num_shards = NUM_SHARDS if total_blocks >= NUM_SHARDS else 1
    steps = int(pl.cdiv(total_blocks, num_shards))
    needs_gate = num_shards * steps > total_blocks   # odd block count

    if needs_gate:
        # Clamp the (single) overhanging step to the last real block; its
        # accumulation is skipped inside the kernel.
        def in_map(c, i):
            return (jnp.minimum(c * steps + i, total_blocks - 1), 0)
    else:
        def in_map(c, i):
            return (c * steps + i, 0)

    kernel = functools.partial(
        _focal_kernel,
        gamma=float(gamma),
        total_blocks=total_blocks,
        steps=steps,
        tile_elems=int(tile_elems),
        tail_rem=int(tail_rem),
        needs_gate=bool(needs_gate),
    )

    partial_sums = pl.pallas_call(
        kernel,
        out_shape=jax.ShapeDtypeStruct((num_shards * SUBLANE, LANE), jnp.float32),
        grid_spec=pltpu.PrefetchScalarGridSpec(
            num_scalar_prefetch=0,
            grid=(num_shards, steps),
            in_specs=[
                pl.BlockSpec((block_rows, LANE), in_map),
                pl.BlockSpec((block_rows, LANE), in_map),
            ],
            out_specs=pl.BlockSpec((SUBLANE, LANE), lambda c, i: (c, 0)),
        ),
        compiler_params=pltpu.CompilerParams(
            dimension_semantics=("parallel", "arbitrary"),
            vmem_limit_bytes=VMEM_LIMIT_BYTES,
        ),
    )(x, t)

    # Single cross-lane reduce + mean + alpha, once, outside the hot loop.
    scale = jnp.float32(float(alpha) / float(n_valid))
    return jnp.sum(partial_sums) * scale


def focal_loss_ref(inputs, targets, alpha=0.25, gamma=5.0):
    """Pure-JAX reference (mirrors the PyTorch module)."""
    x = inputs.astype(jnp.float32)
    t = targets.astype(jnp.float32)
    bce = jnp.maximum(x, 0.0) - x * t + jnp.log1p(jnp.exp(-jnp.abs(x)))
    pt = jnp.exp(-bce)
    return jnp.mean(alpha * (1.0 - pt) ** gamma * bce)


if __name__ == "__main__":
    key = jax.random.PRNGKey(0)

    def run_case(shape, dtype, max_block_rows=MAX_BLOCK_ROWS, seed_offset=0):
        k1, k2 = jax.random.split(jax.random.fold_in(key, seed_offset))
        inputs = (jax.random.normal(k1, shape, dtype=jnp.float32) * 2.0).astype(dtype)
        targets = jax.random.bernoulli(k2, p=0.3, shape=shape).astype(dtype)
        got = jax.block_until_ready(
            focal_loss(inputs, targets, max_block_rows=max_block_rows))
        want = jax.block_until_ready(focal_loss_ref(inputs, targets))
        assert jnp.allclose(got, want, rtol=1e-5, atol=1e-6), (shape, dtype, got, want)

    # Small NCHW logits with binary targets, as the module's forward implies.
    run_case((2, 4, 16, 16), jnp.float32)
    # Ragged / multi-block cases: lane padding, tail masking, 2-shard split,
    # and the odd-block-count clamp gate (tiny max_block_rows forces them).
    run_case((2, 3, 17, 19), jnp.float32, max_block_rows=8, seed_offset=1)
    run_case((3, 4, 16, 16), jnp.float32, max_block_rows=8, seed_offset=2)
    run_case((3, 10, 100), jnp.float32, max_block_rows=8, seed_offset=3)
    # bf16 logits/targets at the call boundary (cast happens in-kernel).
    run_case((2, 4, 16, 16), jnp.bfloat16, seed_offset=4)

    print("KERNEL_OK")
</pallas_src>

<mosaic_0001>
module attributes {stable_mosaic.version = 11 : i64} {
  func.func @_focal_kernel(%arg0: i32, %arg1: i32, %arg2: memref<16x128xf32, #tpu.memory_space<vmem>>, %arg3: memref<16x128xf32, #tpu.memory_space<vmem>>, %arg4: memref<8x128xf32, #tpu.memory_space<vmem>>) attributes {dimension_semantics = [#tpu.dimension_semantics<parallel>, #tpu.dimension_semantics<arbitrary>], iteration_bounds = array<i64: 1, 1>, scalar_prefetch = 0 : i64, scratch_operands = 0 : i64, tpu.core_type = #tpu.core_type<tc>, window_params = [{transform_indices = @transform_0, window_bounds = array<i64: 16, 128>}, {transform_indices = @transform_1, window_bounds = array<i64: 16, 128>}, {transform_indices = @transform_2, window_bounds = array<i64: 8, 128>}]} {
    %c0_i32 = arith.constant 0 : i32
    %0 = arith.cmpi eq, %arg1, %c0_i32 : i32
    %1 = arith.extui %0 : i1 to i32
    %c0_i32_0 = arith.constant 0 : i32
    %2 = arith.cmpi ne, %1, %c0_i32_0 : i32
    scf.if %2 {
      %cst_12 = arith.constant 0.000000e+00 : f32
      %29 = vector.broadcast %cst_12 : f32 to vector<8x128xf32>
      %c0_13 = arith.constant 0 : index
      %c0_14 = arith.constant 0 : index
      %30 = vector.load %arg4[%c0_13, %c0_14] : memref<8x128xf32, #tpu.memory_space<vmem>>, vector<8x128xf32>
      tpu.vector_store %arg4[%c0_13, %c0_14], %29 {strides = array<i32>} : memref<8x128xf32, #tpu.memory_space<vmem>>, vector<8x128xf32>,
    } else {
    }
    %c0 = arith.constant 0 : index
    %c0_1 = arith.constant 0 : index
    %3 = vector.load %arg2[%c0, %c0_1] : memref<16x128xf32, #tpu.memory_space<vmem>>, vector<16x128xf32>
    %c0_2 = arith.constant 0 : index
    %c0_3 = arith.constant 0 : index
    %4 = vector.load %arg3[%c0_2, %c0_3] : memref<16x128xf32, #tpu.memory_space<vmem>>, vector<16x128xf32>
    %cst = arith.constant 0.000000e+00 : f32
    %5 = vector.broadcast %cst : f32 to vector<16x128xf32>
    %6 = arith.maximumf %3, %5 : vector<16x128xf32>
    %7 = arith.mulf %3, %4 : vector<16x128xf32>
    %8 = arith.subf %6, %7 : vector<16x128xf32>
    %9 = math.absf %3 : vector<16x128xf32>
    %cst_4 = arith.constant 0.000000e+00 : f32
    %10 = vector.broadcast %cst_4 : f32 to vector<16x128xf32>
    %11 = arith.subf %10, %9 : vector<16x128xf32>
    %12 = math.exp %11 : vector<16x128xf32>
    %13 = math.log1p %12 : vector<16x128xf32>
    %14 = arith.addf %8, %13 : vector<16x128xf32>
    %cst_5 = arith.constant 0.000000e+00 : f32
    %15 = vector.broadcast %cst_5 : f32 to vector<16x128xf32>
    %16 = arith.subf %15, %14 : vector<16x128xf32>
    %17 = math.exp %16 : vector<16x128xf32>
    %cst_6 = arith.constant 1.000000e+00 : f32
    %18 = vector.broadcast %cst_6 : f32 to vector<16x128xf32>
    %19 = arith.subf %18, %17 : vector<16x128xf32>
    %20 = arith.mulf %19, %19 : vector<16x128xf32>
    %21 = arith.mulf %20, %20 : vector<16x128xf32>
    %22 = arith.mulf %19, %21 : vector<16x128xf32>
    %23 = arith.mulf %14, %22 : vector<16x128xf32>
    %c0_7 = arith.constant 0 : index
    %c0_8 = arith.constant 0 : index
    %24 = vector.load %arg4[%c0_7, %c0_8] : memref<8x128xf32, #tpu.memory_space<vmem>>, vector<8x128xf32>
    %25 = vector.shape_cast %23 : vector<16x128xf32> to vector<2x8x128xf32>
    %cst_9 = arith.constant dense<0.000000e+00> : vector<8x128xf32>
    %26 = vector.multi_reduction <add>, %25, %cst_9 [0] : vector<2x8x128xf32> to vector<8x128xf32>
    %27 = arith.addf %24, %26 : vector<8x128xf32>
    %c0_10 = arith.constant 0 : index
    %c0_11 = arith.constant 0 : index
    %28 = vector.load %arg4[%c0_10, %c0_11] : memref<8x128xf32, #tpu.memory_space<vmem>>, vector<8x128xf32>
    tpu.vector_store %arg4[%c0_10, %c0_11], %27 {strides = array<i32>} : memref<8x128xf32, #tpu.memory_space<vmem>>, vector<8x128xf32>,
    return
  }
  func.func @transform_0(%arg0: i32, %arg1: i32) -> (i32, i32) {
    %c1_i32 = arith.constant 1 : i32
    %0 = arith.muli %arg0, %c1_i32 : i32
    %1 = arith.addi %0, %arg1 : i32
    %c0_i32 = arith.constant 0 : i32
    %c0_i32_0 = arith.constant 0 : i32
    return %1, %c0_i32 : i32, i32
  }
  func.func @transform_1(%arg0: i32, %arg1: i32) -> (i32, i32) {
    %c1_i32 = arith.constant 1 : i32
    %0 = arith.muli %arg0, %c1_i32 : i32
    %1 = arith.addi %0, %arg1 : i32
    %c0_i32 = arith.constant 0 : i32
    %c0_i32_0 = arith.constant 0 : i32
    return %1, %c0_i32 : i32, i32
  }
  func.func @transform_2(%arg0: i32, %arg1: i32) -> (i32, i32) {
    %c0_i32 = arith.constant 0 : i32
    %c0_i32_0 = arith.constant 0 : i32
    return %arg0, %c0_i32 : i32, i32
  }
}

</mosaic_0001>

<llo_original>
// kernel: tpu_custom_call.1
$region0: #{tpu_custom_call.1}
  #allocation0 [shape = 'u32[]', space=smem, size = 0x4, offset = 0x4, fixed_abs, tag = 'smem constant byte address 0x4 - core index']
  #allocation1 [shape = 'u32[144,128]{1,0:T(1,128)}', space=vmem, size = 0x12000, scoped, tag = 'internal scratch']
  %s0 = inlined_call_operand.hbm [shape: f32[16,128], index: 0, kind: input, shape index: {}]
  %s1 = inlined_call_operand.hbm [shape: f32[16,128], index: 1, kind: input, shape index: {}]
  %s2 = inlined_call_operand.hbm [shape: f32[8,128], index: 2, kind: output, shape index: {}]
  %s3 = sld [smem:[#allocation0]]
  $region30: #{tpu_custom_call.1} parent=0
    _
  %s5 = ssub.s32 1, %s3
  %s6 = scalar_select 0, %s5, %s3
  $region1: #{tpu_custom_call.1} parent=0
    #allocation2 [shape = 'u8[8192]{0}', space=vmem, size = 0x2000, scoped, tag = 'input window, operand 0, single buffered']
    #allocation3 [shape = 's32[1]{0}', space=sflag, size = 0x4, scoped, tag = 'scoped memory for tpu_custom_call.1']
    #allocation4 [shape = 's32[1]{0}', space=sflag, size = 0x4, scoped, tag = 'scoped memory for tpu_custom_call.1']
    #allocation5 [shape = 'u8[8192]{0}', space=vmem, size = 0x2000, scoped, tag = 'input window, operand 1, single buffered']
    #allocation6 [shape = 's32[1]{0}', space=sflag, size = 0x4, scoped, tag = 'scoped memory for tpu_custom_call.1']
    #allocation7 [shape = 'u8[4096]{0}', space=vmem, size = 0x1000, scoped, tag = 'output window, operand 0, single buffered']
    %7 = vsyncpa [#allocation3], 0
    %8 = vsyncpa [#allocation6], 0
    %9 = vsyncpa [#allocation4], 0
    // Predicated region
    $region2: #{tpu_custom_call.1} parent=1 // pred_check
      _
    $region3: #{tpu_custom_call.1} parent=1 // pred_check_branch
      %11 = sbr.rel (0) target = $region5
    $region4: #{tpu_custom_call.1} parent=1 // pred_region
      %s12 = sadd.s32 0, 0
      %s13 = smul.u32 2, %s12
      %s15 = ssub.s32 256, 256
      %16 = vsyncadd [#allocation3], %s15
      %s17 = smul.addr %s13, 128
      %s18 = scalar_lea.hbm %s0, %s17
      %s19 = sshll.u32 [#allocation2], 4
      %s20 = int_to_ptr.vmem [resolvable:$true] %s19
      %25 = dma.hbm_to_vmem [thread:$0]  %s18, 256, %s20, [#allocation3], 128, 128, 8
    $region5: #{tpu_custom_call.1} parent=1 // pred_fallthru
      _
    // Predicated region
    $region6: #{tpu_custom_call.1} parent=1 // pred_check
      _
    $region7: #{tpu_custom_call.1} parent=1 // pred_check_branch
      %27 = sbr.rel (0) target = $region9
    $region8: #{tpu_custom_call.1} parent=1 // pred_region
      %s28 = sadd.s32 0, 0
      %s29 = smul.u32 2, %s28
      %s31 = ssub.s32 256, 256
      %32 = vsyncadd [#allocation6], %s31
      %s33 = smul.addr %s29, 128
      %s34 = scalar_lea.hbm %s1, %s33
      %s35 = sshll.u32 [#allocation5], 4
      %s36 = int_to_ptr.vmem [resolvable:$true] %s35
      %41 = dma.hbm_to_vmem [thread:$0]  %s34, 256, %s36, [#allocation6], 128, 128, 8
    $region9: #{tpu_custom_call.1} parent=1 // pred_fallthru
      _
    // Predicated region
    $region10: #{tpu_custom_call.1} parent=1 // pred_check
      _
    $region11: #{tpu_custom_call.1} parent=1 // pred_check_branch
      %43 = sbr.rel (0) target = $region13
    $region12: #{tpu_custom_call.1} parent=1 // pred_region
      %44 = dma.done [#allocation3], 256
    $region13: #{tpu_custom_call.1} parent=1 // pred_fallthru
      _
    // Predicated region
    $region14: #{tpu_custom_call.1} parent=1 // pred_check
      _
    $region15: #{tpu_custom_call.1} parent=1 // pred_check_branch
      %46 = sbr.rel (0) target = $region17
    $region16: #{tpu_custom_call.1} parent=1 // pred_region
      %47 = dma.done [#allocation6], 256
    $region17: #{tpu_custom_call.1} parent=1 // pred_fallthru
      _
    %s48 = sadd.s32 0, 0
    %s49 = smul.u32 2, %s48
    %s50 = sadd.s32 0, 0
    %s51 = smul.u32 2, %s50
    %p52 = scmp.eq.s32.totalorder 0, 0
    // Predicated region
    $region18: #{tpu_custom_call.1} parent=1 // pred_check
      %p53 = pneg %p52
    $region19: #{tpu_custom_call.1} parent=1 // pred_check_branch
      %55 = sbr.rel (%p53) target = $region21
    $region20: #{tpu_custom_call.1} parent=1 // pred_region
      %56 = vst [vmem:[#allocation7] sm:$0xff] 0.0
    $region21: #{tpu_custom_call.1} parent=1 // pred_fallthru
      _
    %v57 = vld [vmem:[#allocation2] sm:$0xff]
    %v58 = vld [vmem:[#allocation2 + $0x8] sm:$0xff]
    %v59 = vld [vmem:[#allocation5] sm:$0xff]
    %v60 = vld [vmem:[#allocation5 + $0x8] sm:$0xff]
    %v61 = vmax.f32 %v57, 0.0
    %v62 = vmax.f32 %v58, 0.0
    %v63 = vmul.f32 %v57, %v59
    %v64 = vmul.f32 %v58, %v60
    %v65 = vsub.f32 %v61, %v63
    %v66 = vsub.f32 %v62, %v64
    %v67 = vand.u32 2147483647, %v57
    %v68 = vand.u32 2147483647, %v58
    %v69 = vsub.f32 0.0, %v67
    %v70 = vsub.f32 0.0, %v68
    %v71 = vmul.f32 %v69, 1.442695
    %v72 = vpow.pop %v71
    %v73 = vmul.f32 %v70, 1.442695
    %v74 = vpow.pop %v73
    %v75 = vadd.f32 %v72, 1.0
    %v76 = vlog2.pop %v75
    %v77 = vmul.f32 %v76, 0.6931472
    %v78 = vmul.f32 -0.5, %v72
    %v79 = vadd.f32 %v78, 1.0
    %v80 = vmul.f32 %v79, %v72
    %v81 = vand.u32 2147483647, %v72
    %vm82 = vcmp.lt.f32.partialorder %v81, 0.0004427343
    %v83 = vsel %vm82, %v80, %v77
    %v84 = vadd.f32 %v74, 1.0
    %v85 = vlog2.pop %v84
    %v86 = vmul.f32 %v85, 0.6931472
    %v87 = vmul.f32 -0.5, %v74
    %v88 = vadd.f32 %v87, 1.0
    %v89 = vmul.f32 %v88, %v74
    %v90 = vand.u32 2147483647, %v74
    %vm91 = vcmp.lt.f32.partialorder %v90, 0.0004427343
    %v92 = vsel %vm91, %v89, %v86
    %v93 = vadd.f32 %v65, %v83
    %v94 = vadd.f32 %v66, %v92
    %v95 = vsub.f32 0.0, %v93
    %v96 = vsub.f32 0.0, %v94
    %v97 = vmul.f32 %v95, 1.442695
    %v98 = vpow.pop %v97
    %v99 = vmul.f32 %v96, 1.442695
    %v100 = vpow.pop %v99
    %v101 = vsub.f32 1.0, %v98
    %v102 = vsub.f32 1.0, %v100
    %v103 = vmul.f32 %v101, %v101
    %v104 = vmul.f32 %v102, %v102
    %v105 = vmul.f32 %v103, %v103
    %v106 = vmul.f32 %v104, %v104
    %v107 = vmul.f32 %v101, %v105
    %v108 = vmul.f32 %v102, %v106
    %v109 = vmul.f32 %v93, %v107
    %v110 = vmul.f32 %v94, %v108
    %v111 = vld [vmem:[#allocation7] sm:$0xff]
    %v112 = vadd.f32 %v109, %v110
    %v113 = vadd.f32 %v111, %v112
    %114 = vst [vmem:[#allocation7] sm:$0xff] %v113
    // Predicated region
    $region22: #{tpu_custom_call.1} parent=1 // pred_check
      _
    $region23: #{tpu_custom_call.1} parent=1 // pred_check_branch
      %116 = sbr.rel (0) target = $region25
    $region24: #{tpu_custom_call.1} parent=1 // pred_region
      %s118 = ssub.s32 128, 128
      %119 = vsyncadd [#allocation4], %s118
      %s121 = sshll.u32 [#allocation7], 4
      %s122 = int_to_ptr.vmem [resolvable:$true] %s121
      %124 = dma.vmem_to_hbm [thread:$0]  %s122, 128, %s2, [#allocation4]
    $region25: #{tpu_custom_call.1} parent=1 // pred_fallthru
      _
    // Predicated region
    $region26: #{tpu_custom_call.1} parent=1 // pred_check
      _
    $region27: #{tpu_custom_call.1} parent=1 // pred_check_branch
      %126 = sbr.rel (0) target = $region29
    $region28: #{tpu_custom_call.1} parent=1 // pred_region
      %127 = dma.done [#allocation4], 128
    $region29: #{tpu_custom_call.1} parent=1 // pred_fallthru
      _
    %128 = vsyncpa [#allocation3], 1
    %129 = vsyncpa [#allocation6], 1
    %130 = vsyncpa [#allocation4], 1

</llo_original>
